<compile_context>
chip_gen: v7x
topology: tpu7x:2x2x1
jax: 0.10.0
libtpu: 0.0.40
codegen_flags: <defaults>
</compile_context>

<pallas_src>
import functools

import jax
import jax.numpy as jnp
import numpy as np
from jax.experimental import pallas as pl
from jax.experimental.pallas import tpu as pltpu


def _round_up(x, m):
    return ((x + m - 1) // m) * m


def _loss_kernel(pred_ref, tgt_ref, amp_ref, out_sl1_ref, out_seas_ref,
                 acc_ref, seas_ref):
    """Grid: (chunk [parallel], station-tile [arbitrary], time-tile [arbitrary]).

    Per step: elementwise smooth-L1 partial sums accumulated into a full-block f32 VMEM
    accumulator (VPU only). Seasonal penalty evaluated once per station tile. At the end
    of each chunk, a single reduce produces that chunk's two partial sums.
    """
    si = pl.program_id(1)          # station-tile index within chunk (reduction)
    ti = pl.program_id(2)          # time-tile index (reduction, innermost)
    n_si = pl.num_programs(1)
    n_ti = pl.num_programs(2)

    # ---- chunk start: reset accumulators ----
    @pl.when(jnp.logical_and(si == 0, ti == 0))
    def _():
        acc_ref[...] = jnp.zeros_like(acc_ref)
        seas_ref[0] = jnp.float32(0.0)

    # ---- smooth L1 (beta = 1.0, PyTorch default), elementwise accumulation ----
    diff = pred_ref[...].astype(jnp.float32) - tgt_ref[...].astype(jnp.float32)
    absd = jnp.abs(diff)
    acc_ref[...] += jnp.where(absd < 1.0, 0.5 * diff * diff, absd - 0.5)

    # ---- seasonal regularization partial: once per station tile (hoisted out of time loop)
    @pl.when(ti == 0)
    def _():
        amp_sum = jnp.sum(amp_ref[...].astype(jnp.float32), axis=1, keepdims=True)
        seas_ref[0] += jnp.sum(jnp.maximum(amp_sum - 50.0, 0.0))

    # ---- chunk end: single cross-lane/sublane reduce, write this chunk's partials ----
    @pl.when(jnp.logical_and(si == n_si - 1, ti == n_ti - 1))
    def _():
        ones = jnp.ones(out_sl1_ref.shape, jnp.float32)
        out_sl1_ref[...] = ones * jnp.sum(acc_ref[...])
        out_seas_ref[...] = ones * seas_ref[0]


def optimal_insar_loss(predicted, target, seasonal_amplitudes, alpha_seasonal=0.05,
                       target_block_bytes=2 * 1024 * 1024, num_parallel_chunks=2):
    """Pallas TPU implementation of OptimalInSARLoss.forward.

    Accepts f32 or bf16 predicted/target (cast to f32 inside the kernel).
    """
    n_stations, n_timepoints = predicted.shape
    assert target.shape == (n_stations, n_timepoints)
    assert seasonal_amplitudes.shape[0] == n_stations
    n_amp = seasonal_amplitudes.shape[1]

    itemsize = np.dtype(predicted.dtype).itemsize

    # --- time tiling: lane-dense multiple of 128; cap per-block lanes for huge T ---
    max_tile_t = 2048
    t_pad = _round_up(n_timepoints, 128)
    if t_pad <= max_tile_t:
        tile_t = t_pad
    else:
        tile_t = max_tile_t
        t_pad = _round_up(t_pad, tile_t)

    # --- station tiling: ~target_block_bytes per streamed input block ---
    n_chunks = num_parallel_chunks if n_stations >= 8 * num_parallel_chunks else 1
    stations_per_chunk = _round_up(-(-n_stations // n_chunks), 8)
    target_rows = max(8, (target_block_bytes // (tile_t * itemsize)) // 8 * 8)
    tile_s = int(min(target_rows, stations_per_chunk))
    tiles_per_chunk = -(-stations_per_chunk // tile_s)
    n_pad = n_chunks * tiles_per_chunk * tile_s

    # --- zero-pad ragged shapes (zeros contribute 0 to both loss terms) ---
    if n_pad != n_stations or t_pad != n_timepoints:
        predicted = jnp.pad(predicted,
                            ((0, n_pad - n_stations), (0, t_pad - n_timepoints)))
        target = jnp.pad(target,
                         ((0, n_pad - n_stations), (0, t_pad - n_timepoints)))
    if n_pad != n_stations:
        seasonal_amplitudes = jnp.pad(seasonal_amplitudes,
                                      ((0, n_pad - n_stations), (0, 0)))

    grid = (n_chunks, tiles_per_chunk, t_pad // tile_t)

    out_shape = (jax.ShapeDtypeStruct((n_chunks, 8, 128), jnp.float32),
                 jax.ShapeDtypeStruct((n_chunks, 8, 128), jnp.float32))

    out_sl1, out_seas = pl.pallas_call(
        _loss_kernel,
        out_shape=out_shape,
        grid_spec=pltpu.PrefetchScalarGridSpec(
            num_scalar_prefetch=0,
            grid=grid,
            in_specs=[
                pl.BlockSpec((tile_s, tile_t),
                             lambda c, si, ti: (c * tiles_per_chunk + si, ti)),
                pl.BlockSpec((tile_s, tile_t),
                             lambda c, si, ti: (c * tiles_per_chunk + si, ti)),
                pl.BlockSpec((tile_s, n_amp),
                             lambda c, si, ti: (c * tiles_per_chunk + si, 0)),
            ],
            out_specs=[
                pl.BlockSpec((1, 8, 128), lambda c, si, ti: (c, 0, 0)),
                pl.BlockSpec((1, 8, 128), lambda c, si, ti: (c, 0, 0)),
            ],
            scratch_shapes=[
                pltpu.VMEM((tile_s, tile_t), jnp.float32),   # smooth-L1 accumulator
                pltpu.SMEM((1,), jnp.float32),               # seasonal partial (rare RMW)
            ],
        ),
        compiler_params=pltpu.CompilerParams(
            dimension_semantics=("parallel", "arbitrary", "arbitrary"),
            vmem_limit_bytes=32 * 1024 * 1024,
        ),
    )(predicted, target, seasonal_amplitudes)

    # Combine per-chunk partials and normalize with the *true* (unpadded) sizes.
    sl1_sum = jnp.sum(out_sl1[:, 0, 0])
    seas_sum = jnp.sum(out_seas[:, 0, 0])
    primary = sl1_sum / jnp.float32(n_stations * n_timepoints)
    seasonal = seas_sum / jnp.float32(n_stations)
    return primary + jnp.float32(alpha_seasonal) * seasonal


# --- pure-JAX reference (mirrors the PyTorch module) -------------------------
def optimal_insar_loss_ref(predicted, target, seasonal_amplitudes, alpha_seasonal=0.05):
    diff = predicted.astype(jnp.float32) - target.astype(jnp.float32)
    absd = jnp.abs(diff)
    sl1 = jnp.where(absd < 1.0, 0.5 * diff * diff, absd - 0.5)
    primary = jnp.mean(sl1)
    amp_sum = jnp.sum(seasonal_amplitudes.astype(jnp.float32), axis=1)
    seasonal = jnp.mean(jnp.maximum(amp_sum - 50.0, 0.0))
    return primary + alpha_seasonal * seasonal


# --- signal model forward in plain JAX (glue to produce `predicted`) ----------
# TODO(synk): optionally fuse signal_model_forward into the loss kernel so `predicted`
#             never round-trips HBM (sin lands on the otherwise-idle EUP slot).
def signal_model_forward(time_vector, constant_offset, linear_trend,
                         seasonal_amplitudes, seasonal_phases, periods):
    t = time_vector[None, :]                                          # (1, T)
    signals = constant_offset[:, None] + linear_trend[:, None] * t    # (N, T)
    for i in range(periods.shape[0]):
        amp = seasonal_amplitudes[:, i][:, None]
        phase = seasonal_phases[:, i][:, None]
        freq = 1.0 / periods[i]
        signals = signals + amp * jnp.sin(2.0 * np.pi * freq * t + phase)
    return signals


if __name__ == "__main__":
    n_stations = 64
    n_timepoints = 128
    alpha_seasonal = 0.05

    key = jax.random.PRNGKey(0)
    k_rates, k_phase, k_target = jax.random.split(key, 3)

    # Deterministic parameter init per OptimalInSARSignalModel.__init__
    constant_offset = jnp.zeros((n_stations,), dtype=jnp.float32)
    linear_trend = jax.random.normal(k_rates, (n_stations,), dtype=jnp.float32)  # ps00_rates
    seasonal_amplitudes = jnp.ones((n_stations, 4), dtype=jnp.float32) * 3.0
    # Push some rows over the 50-threshold so the seasonal branch is exercised.
    seasonal_amplitudes = seasonal_amplitudes.at[: n_stations // 4].set(15.0)
    seasonal_phases = jax.random.uniform(k_phase, (n_stations, 4),
                                         dtype=jnp.float32) * 2.0 * np.pi
    periods = jnp.array([0.25, 0.5, 1.0, 2.0], dtype=jnp.float32)

    time_vector = jnp.linspace(0.0, 2.0, n_timepoints, dtype=jnp.float32)

    predicted = signal_model_forward(time_vector, constant_offset, linear_trend,
                                     seasonal_amplitudes, seasonal_phases, periods)
    target = predicted + 0.5 * jax.random.normal(k_target, predicted.shape,
                                                 dtype=jnp.float32)

    loss = optimal_insar_loss(predicted, target, seasonal_amplitudes,
                              alpha_seasonal=alpha_seasonal)
    loss = jax.block_until_ready(loss)
    loss_ref = optimal_insar_loss_ref(predicted, target, seasonal_amplitudes,
                                      alpha_seasonal=alpha_seasonal)
    np.testing.assert_allclose(np.asarray(loss), np.asarray(loss_ref),
                               rtol=1e-5, atol=1e-5)

    # Ragged-shape check (exercises zero-padding of stations and time).
    k1, k2, k3 = jax.random.split(jax.random.PRNGKey(1), 3)
    pred2 = jax.random.normal(k1, (37, 100), dtype=jnp.float32)
    tgt2 = pred2 + jax.random.normal(k2, (37, 100), dtype=jnp.float32)
    amp2 = jax.random.uniform(k3, (37, 4), dtype=jnp.float32) * 20.0
    loss2 = jax.block_until_ready(
        optimal_insar_loss(pred2, tgt2, amp2, alpha_seasonal=alpha_seasonal))
    loss2_ref = optimal_insar_loss_ref(pred2, tgt2, amp2, alpha_seasonal=alpha_seasonal)
    np.testing.assert_allclose(np.asarray(loss2), np.asarray(loss2_ref),
                               rtol=1e-5, atol=1e-5)

    print("KERNEL_OK")
</pallas_src>

<mosaic_0001>
module attributes {stable_mosaic.version = 11 : i64} {
  func.func @_loss_kernel(%arg0: i32, %arg1: i32, %arg2: i32, %arg3: memref<32x128xf32, #tpu.memory_space<vmem>>, %arg4: memref<32x128xf32, #tpu.memory_space<vmem>>, %arg5: memref<32x4xf32, #tpu.memory_space<vmem>>, %arg6: memref<1x8x128xf32, #tpu.memory_space<vmem>>, %arg7: memref<1x8x128xf32, #tpu.memory_space<vmem>>, %arg8: memref<32x128xf32, #tpu.memory_space<vmem>>, %arg9: memref<1xf32, #tpu.memory_space<smem>>) attributes {dimension_semantics = [#tpu.dimension_semantics<parallel>, #tpu.dimension_semantics<arbitrary>, #tpu.dimension_semantics<arbitrary>], iteration_bounds = array<i64: 2, 1, 1>, scalar_prefetch = 0 : i64, scratch_operands = 2 : i64, tpu.core_type = #tpu.core_type<tc>, window_params = [{transform_indices = @transform_0, window_bounds = array<i64: 32, 128>}, {transform_indices = @transform_1, window_bounds = array<i64: 32, 128>}, {transform_indices = @transform_2, window_bounds = array<i64: 32, 4>}, {transform_indices = @transform_3, window_bounds = array<i64: 1, 8, 128>}, {transform_indices = @transform_4, window_bounds = array<i64: 1, 8, 128>}]} {
    %c0_i32 = arith.constant 0 : i32
    %0 = arith.cmpi eq, %arg1, %c0_i32 : i32
    %c0_i32_0 = arith.constant 0 : i32
    %1 = arith.cmpi eq, %arg2, %c0_i32_0 : i32
    %2 = arith.andi %0, %1 : i1
    %3 = arith.extui %2 : i1 to i32
    %c0_i32_1 = arith.constant 0 : i32
    %4 = arith.cmpi ne, %3, %c0_i32_1 : i32
    scf.if %4 {
      %cst_16 = arith.constant 0.000000e+00 : f32
      %28 = vector.broadcast %cst_16 : f32 to vector<32x128xf32>
      %c0_17 = arith.constant 0 : index
      %c0_18 = arith.constant 0 : index
      %29 = vector.load %arg8[%c0_17, %c0_18] : memref<32x128xf32, #tpu.memory_space<vmem>>, vector<32x128xf32>
      tpu.vector_store %arg8[%c0_17, %c0_18], %28 {strides = array<i32>} : memref<32x128xf32, #tpu.memory_space<vmem>>, vector<32x128xf32>,
      %cst_19 = arith.constant 0.000000e+00 : f32
      %c0_20 = arith.constant 0 : index
      %30 = memref.load %arg9[%c0_20] : memref<1xf32, #tpu.memory_space<smem>>
      memref.store %cst_19, %arg9[%c0_20] : memref<1xf32, #tpu.memory_space<smem>>
    } else {
    }
    %c0 = arith.constant 0 : index
    %c0_2 = arith.constant 0 : index
    %5 = vector.load %arg3[%c0, %c0_2] : memref<32x128xf32, #tpu.memory_space<vmem>>, vector<32x128xf32>
    %c0_3 = arith.constant 0 : index
    %c0_4 = arith.constant 0 : index
    %6 = vector.load %arg4[%c0_3, %c0_4] : memref<32x128xf32, #tpu.memory_space<vmem>>, vector<32x128xf32>
    %7 = arith.subf %5, %6 : vector<32x128xf32>
    %8 = math.absf %7 : vector<32x128xf32>
    %c0_5 = arith.constant 0 : index
    %c0_6 = arith.constant 0 : index
    %9 = vector.load %arg8[%c0_5, %c0_6] : memref<32x128xf32, #tpu.memory_space<vmem>>, vector<32x128xf32>
    %cst = arith.constant 1.000000e+00 : f32
    %10 = vector.broadcast %cst : f32 to vector<32x128xf32>
    %11 = arith.cmpf olt, %8, %10 : vector<32x128xf32>
    %cst_7 = arith.constant 5.000000e-01 : f32
    %12 = vector.broadcast %cst_7 : f32 to vector<32x128xf32>
    %13 = arith.mulf %12, %7 : vector<32x128xf32>
    %14 = arith.mulf %13, %7 : vector<32x128xf32>
    %cst_8 = arith.constant 5.000000e-01 : f32
    %15 = vector.broadcast %cst_8 : f32 to vector<32x128xf32>
    %16 = arith.subf %8, %15 : vector<32x128xf32>
    %17 = arith.select %11, %14, %16 : vector<32x128xi1>, vector<32x128xf32>
    %18 = arith.addf %9, %17 : vector<32x128xf32>
    %c0_9 = arith.constant 0 : index
    %c0_10 = arith.constant 0 : index
    %19 = vector.load %arg8[%c0_9, %c0_10] : memref<32x128xf32, #tpu.memory_space<vmem>>, vector<32x128xf32>
    tpu.vector_store %arg8[%c0_9, %c0_10], %18 {strides = array<i32>} : memref<32x128xf32, #tpu.memory_space<vmem>>, vector<32x128xf32>,
    %c0_i32_11 = arith.constant 0 : i32
    %20 = arith.cmpi eq, %arg2, %c0_i32_11 : i32
    %21 = arith.extui %20 : i1 to i32
    %c0_i32_12 = arith.constant 0 : i32
    %22 = arith.cmpi ne, %21, %c0_i32_12 : i32
    scf.if %22 {
      %c0_16 = arith.constant 0 : index
      %c0_17 = arith.constant 0 : index
      %28 = vector.load %arg5[%c0_16, %c0_17] : memref<32x4xf32, #tpu.memory_space<vmem>>, vector<32x4xf32>
      %cst_18 = arith.constant dense<0.000000e+00> : vector<32xf32>
      %29 = vector.multi_reduction <add>, %28, %cst_18 [1] : vector<32x4xf32> to vector<32xf32>
      %30 = vector.shape_cast %29 : vector<32xf32> to vector<32x1xf32>
      %c0_19 = arith.constant 0 : index
      %31 = memref.load %arg9[%c0_19] : memref<1xf32, #tpu.memory_space<smem>>
      %cst_20 = arith.constant 5.000000e+01 : f32
      %32 = vector.broadcast %cst_20 : f32 to vector<32x1xf32>
      %33 = arith.subf %30, %32 : vector<32x1xf32>
      %cst_21 = arith.constant 0.000000e+00 : f32
      %34 = vector.broadcast %cst_21 : f32 to vector<32x1xf32>
      %35 = arith.maximumf %33, %34 : vector<32x1xf32>
      %36 = vector.shape_cast %35 : vector<32x1xf32> to vector<1x32x1xf32>
      %cst_22 = arith.constant dense<0.000000e+00> : vector<1xf32>
      %37 = vector.multi_reduction <add>, %36, %cst_22 [1, 2] : vector<1x32x1xf32> to vector<1xf32>
      %38 = vector.shape_cast %37 : vector<1xf32> to vector<1x1x1xf32>
      %39 = vector.extract %38[0, 0, 0] : f32 from vector<1x1x1xf32>
      %40 = arith.addf %31, %39 : f32
      %c0_23 = arith.constant 0 : index
      %41 = memref.load %arg9[%c0_23] : memref<1xf32, #tpu.memory_space<smem>>
      memref.store %40, %arg9[%c0_23] : memref<1xf32, #tpu.memory_space<smem>>
    } else {
    }
    %c0_i32_13 = arith.constant 0 : i32
    %23 = arith.cmpi eq, %arg1, %c0_i32_13 : i32
    %c0_i32_14 = arith.constant 0 : i32
    %24 = arith.cmpi eq, %arg2, %c0_i32_14 : i32
    %25 = arith.andi %23, %24 : i1
    %26 = arith.extui %25 : i1 to i32
    %c0_i32_15 = arith.constant 0 : i32
    %27 = arith.cmpi ne, %26, %c0_i32_15 : i32
    scf.if %27 {
      %cst_16 = arith.constant 1.000000e+00 : f32
      %28 = vector.broadcast %cst_16 : f32 to vector<1x8x128xf32>
      %c0_17 = arith.constant 0 : index
      %c0_18 = arith.constant 0 : index
      %29 = vector.load %arg8[%c0_17, %c0_18] : memref<32x128xf32, #tpu.memory_space<vmem>>, vector<32x128xf32>
      %30 = vector.shape_cast %29 : vector<32x128xf32> to vector<1x32x128xf32>
      %cst_19 = arith.constant dense<0.000000e+00> : vector<1xf32>
      %31 = vector.multi_reduction <add>, %30, %cst_19 [1, 2] : vector<1x32x128xf32> to vector<1xf32>
      %32 = vector.shape_cast %31 : vector<1xf32> to vector<1x1x1xf32>
      %33 = vector.extract %32[0, 0, 0] : f32 from vector<1x1x1xf32>
      %34 = vector.broadcast %33 : f32 to vector<1x8x128xf32>
      %35 = arith.mulf %28, %34 : vector<1x8x128xf32>
      %c0_20 = arith.constant 0 : index
      %c0_21 = arith.constant 0 : index
      %c0_22 = arith.constant 0 : index
      %36 = vector.load %arg6[%c0_20, %c0_21, %c0_22] : memref<1x8x128xf32, #tpu.memory_space<vmem>>, vector<1x8x128xf32>
      tpu.vector_store %arg6[%c0_20, %c0_21, %c0_22], %35 {strides = array<i32>} : memref<1x8x128xf32, #tpu.memory_space<vmem>>, vector<1x8x128xf32>,
      %c0_23 = arith.constant 0 : index
      %37 = memref.load %arg9[%c0_23] : memref<1xf32, #tpu.memory_space<smem>>
      %38 = vector.broadcast %37 : f32 to vector<1x8x128xf32>
      %39 = arith.mulf %28, %38 : vector<1x8x128xf32>
      %c0_24 = arith.constant 0 : index
      %c0_25 = arith.constant 0 : index
      %c0_26 = arith.constant 0 : index
      %40 = vector.load %arg7[%c0_24, %c0_25, %c0_26] : memref<1x8x128xf32, #tpu.memory_space<vmem>>, vector<1x8x128xf32>
      tpu.vector_store %arg7[%c0_24, %c0_25, %c0_26], %39 {strides = array<i32>} : memref<1x8x128xf32, #tpu.memory_space<vmem>>, vector<1x8x128xf32>,
    } else {
    }
    return
  }
  func.func @transform_0(%arg0: i32, %arg1: i32, %arg2: i32) -> (i32, i32) {
    %c1_i32 = arith.constant 1 : i32
    %0 = arith.muli %arg0, %c1_i32 : i32
    %1 = arith.addi %0, %arg1 : i32
    %c0_i32 = arith.constant 0 : i32
    return %1, %arg2 : i32, i32
  }
  func.func @transform_1(%arg0: i32, %arg1: i32, %arg2: i32) -> (i32, i32) {
    %c1_i32 = arith.constant 1 : i32
    %0 = arith.muli %arg0, %c1_i32 : i32
    %1 = arith.addi %0, %arg1 : i32
    %c0_i32 = arith.constant 0 : i32
    return %1, %arg2 : i32, i32
  }
  func.func @transform_2(%arg0: i32, %arg1: i32, %arg2: i32) -> (i32, i32) {
    %c1_i32 = arith.constant 1 : i32
    %0 = arith.muli %arg0, %c1_i32 : i32
    %1 = arith.addi %0, %arg1 : i32
    %c0_i32 = arith.constant 0 : i32
    %c0_i32_0 = arith.constant 0 : i32
    return %1, %c0_i32 : i32, i32
  }
  func.func @transform_3(%arg0: i32, %arg1: i32, %arg2: i32) -> (i32, i32, i32) {
    %c0_i32 = arith.constant 0 : i32
    %c0_i32_0 = arith.constant 0 : i32
    %c0_i32_1 = arith.constant 0 : i32
    return %arg0, %c0_i32, %c0_i32_0 : i32, i32, i32
  }
  func.func @transform_4(%arg0: i32, %arg1: i32, %arg2: i32) -> (i32, i32, i32) {
    %c0_i32 = arith.constant 0 : i32
    %c0_i32_0 = arith.constant 0 : i32
    %c0_i32_1 = arith.constant 0 : i32
    return %arg0, %c0_i32, %c0_i32_0 : i32, i32, i32
  }
}

</mosaic_0001>

<llo_original>
// kernel: tpu_custom_call.1
$region0: #{tpu_custom_call.1}
  #allocation0 [shape = 'u32[]', space=smem, size = 0x4, offset = 0x4, fixed_abs, tag = 'smem constant byte address 0x4 - core index']
  #allocation1 [shape = 'u32[144,128]{1,0:T(1,128)}', space=vmem, size = 0x12000, scoped, tag = 'internal scratch']
  #allocation2 [shape = 'f32[32,128]{1,0:T(8,128)}', space=vmem, size = 0x4000, scoped, tag = 'scratch operand']
  #allocation3 [shape = 'f32[1]{0:T(128)}', space=smem, size = 0x200, scoped, tag = 'scratch operand']
  %s0 = inlined_call_operand.vmem [shape: f32[64,128], index: 0, kind: input, shape index: {}]
  %s1 = inlined_call_operand.hbm [shape: f32[64,128], index: 1, kind: input, shape index: {}]
  %s2 = inlined_call_operand.vmem [shape: f32[64,4], index: 2, kind: input, shape index: {}]
  %s3 = inlined_call_operand.hbm [shape: f32[2,8,128], index: 3, kind: output, shape index: {0}]
  %s4 = inlined_call_operand.hbm [shape: f32[2,8,128], index: 4, kind: output, shape index: {1}]
  %5 = xla_tuple %s3, %s4
  %s6 = sld [smem:[#allocation0]]
  $region69: #{tpu_custom_call.1} parent=0
    _
  %s8 = ssub.s32 1, %s6
  %s9 = scalar_select 0, %s8, %s6
  $region1: #{tpu_custom_call.1} parent=0
    #allocation4 [shape = 'u8[32768]{0}', space=vmem, size = 0x8000, scoped, tag = 'input window, operand 1']
    #allocation5 [shape = 's32[2]{0}', space=sflag, size = 0x8, scoped, tag = 'scoped memory for tpu_custom_call.1']
    #allocation6 [shape = 's32[2]{0}', space=sflag, size = 0x8, scoped, tag = 'scoped memory for tpu_custom_call.1']
    #allocation7 [shape = 'u8[8192]{0}', space=vmem, size = 0x2000, scoped, tag = 'output window, operand 0']
    #allocation8 [shape = 'u8[8192]{0}', space=vmem, size = 0x2000, scoped, tag = 'output window, operand 1']
    #allocation9 [shape = 's32[2]{0}', space=sflag, size = 0x8, scoped, tag = 'scoped memory for tpu_custom_call.1']
    %10 = vsyncpa [#allocation5], 0
    %s11 = scalar_lea.sflag [#allocation5], 1
    %12 = vsyncpa %s11, 0
    %13 = vsyncpa [#allocation6], 0
    %s14 = scalar_lea.sflag [#allocation6], 1
    %15 = vsyncpa %s14, 0
    %16 = vsyncpa [#allocation9], 0
    %s17 = scalar_lea.sflag [#allocation9], 1
    %18 = vsyncpa %s17, 0
    loop: start=0, step=1, limit=4
    $region2: #{tpu_custom_call.1} parent=1 // loop_pre_header
      _
    $region3: #{tpu_custom_call.1} parent=1 // loop_header
      %s20 = sphi 0, %s24
      %p21 = scmp.ge.s32.totalorder %s20, 4
      %s27 = sphi 0, %s46
      %s28 = sphi 0, %s42
      %s29 = sphi 0, %s38
      %s30 = sphi 0, %s27
      %s31 = sphi 0, %s28
      %s32 = sphi 0, %s29
      %s33 = sphi 0, %s30
      %s34 = sphi 0, %s31
      %s35 = sphi 0, %s32
      %s53 = sphi 0, %s55
      %s56 = sphi 0, %s53
      %s57 = sphi 0, %s56
      %s73 = sphi 0, %s57
      %s83 = sphi 0, %s85
      %s86 = sphi 0, %s83
      %s87 = sphi 0, %s86
      %s103 = sphi 0, %s87
      %s111 = sphi 0, %s113
      %s114 = sphi 0, %s111
      %s115 = sphi 0, %s114
      %s131 = sphi 0, %s115
      %s137 = sphi 0, %s139
      %s140 = sphi 0, %s137
      %s141 = sphi 0, %s140
      %s157 = sphi 0, %s141
      %s163 = sphi 0, %s165
      %s166 = sphi 0, %s163
      %s167 = sphi 0, %s166
      %s183 = sphi 0, %s167
    $region4: #{tpu_custom_call.1} parent=1 // loop_header_branch
      %23 = sbr.rel (%p21) target = $region8
    $region5: #{tpu_custom_call.1} parent=1 // loop_body
      %s25 = ssub.s32 %s20, 1
      %s26 = ssub.s32 %s20, 2
      %s36 = sadd.s32 1, %s29
      %p37 = scmp.ge.s32.totalorder %s36, 1
      %s38 = scalar_select %p37, 0, %s36
      %s39 = sadd.s32 1, %s28
      %s40 = scalar_select %p37, %s39, %s28
      %p41 = scmp.ge.s32.totalorder %s40, 1
      %s42 = scalar_select %p41, 0, %s40
      %s43 = sadd.s32 1, %s27
      %s44 = scalar_select %p41, %s43, %s27
      %p45 = scmp.ge.s32.totalorder %s44, 2
      %s46 = scalar_select %p45, 0, %s44
      %s47 = sadd.s32 %s27, %s28
      %s48 = sadd.s32 %s46, %s42
      %s49 = ssub.s32 %s47, %s48
      %s50 = ssub.s32 %s29, %s38
      %s51 = sor.u32 %s49, %s50
      %p52 = scmp.eq.s32.totalorder %s51, 0
      %s54 = sadd.s32 %s53, 1
      %s55 = scalar_select %p52, %s53, %s54
      %p58 = pneg %p52
      %p59 = scmp.eq.s32.totalorder %s20, 1
      %p60 = por %p58, %p59
      %p61 = scmp.ne.s32.totalorder %s53, %s56
      %p62 = scmp.eq.s32.totalorder %s20, 0
      %p63 = por %p61, %p62
      %p64 = scmp.ne.s32.totalorder %s53, %s56
      %p65 = scmp.eq.s32.totalorder %s25, 1
      %p66 = por %p64, %p65
      %p67 = scmp.ne.s32.totalorder %s56, %s57
      %p68 = scmp.eq.s32.totalorder %s25, 0
      %p69 = por %p67, %p68
      %p70 = scmp.ne.s32.totalorder %s56, %s57
      %p71 = scmp.eq.s32.totalorder %s26, 1
      %p72 = por %p70, %p71
      %p74 = scmp.ne.s32.totalorder %s57, %s73
      %p75 = scmp.eq.s32.totalorder %s26, 0
      %p76 = por %p74, %p75
      %s77 = sadd.s32 %s27, %s28
      %s78 = sadd.s32 %s46, %s42
      %s79 = ssub.s32 %s77, %s78
      %s80 = ssub.s32 %s29, %s38
      %s81 = sor.u32 %s79, %s80
      %p82 = scmp.eq.s32.totalorder %s81, 0
      %s84 = sadd.s32 %s83, 1
      %s85 = scalar_select %p82, %s83, %s84
      %p88 = pneg %p82
      %p89 = scmp.eq.s32.totalorder %s20, 1
      %p90 = por %p88, %p89
      %p91 = scmp.ne.s32.totalorder %s83, %s86
      %p92 = scmp.eq.s32.totalorder %s20, 0
      %p93 = por %p91, %p92
      %p94 = scmp.ne.s32.totalorder %s83, %s86
      %p95 = scmp.eq.s32.totalorder %s25, 1
      %p96 = por %p94, %p95
      %p97 = scmp.ne.s32.totalorder %s86, %s87
      %p98 = scmp.eq.s32.totalorder %s25, 0
      %p99 = por %p97, %p98
      %p100 = scmp.ne.s32.totalorder %s86, %s87
      %p101 = scmp.eq.s32.totalorder %s26, 1
      %p102 = por %p100, %p101
      %p104 = scmp.ne.s32.totalorder %s87, %s103
      %p105 = scmp.eq.s32.totalorder %s26, 0
      %p106 = por %p104, %p105
      %s107 = sadd.s32 %s27, %s28
      %s108 = sadd.s32 %s46, %s42
      %s109 = ssub.s32 %s107, %s108
      %p110 = scmp.eq.s32.totalorder %s109, 0
      %s112 = sadd.s32 %s111, 1
      %s113 = scalar_select %p110, %s111, %s112
      %p116 = pneg %p110
      %p117 = scmp.eq.s32.totalorder %s20, 1
      %p118 = por %p116, %p117
      %p119 = scmp.ne.s32.totalorder %s111, %s114
      %p120 = scmp.eq.s32.totalorder %s20, 0
      %p121 = por %p119, %p120
      %p122 = scmp.ne.s32.totalorder %s111, %s114
      %p123 = scmp.eq.s32.totalorder %s25, 1
      %p124 = por %p122, %p123
      %p125 = scmp.ne.s32.totalorder %s114, %s115
      %p126 = scmp.eq.s32.totalorder %s25, 0
      %p127 = por %p125, %p126
      %p128 = scmp.ne.s32.totalorder %s114, %s115
      %p129 = scmp.eq.s32.totalorder %s26, 1
      %p130 = por %p128, %p129
      %p132 = scmp.ne.s32.totalorder %s115, %s131
      %p133 = scmp.eq.s32.totalorder %s26, 0
      %p134 = por %p132, %p133
      %s135 = ssub.s32 %s27, %s46
      %p136 = scmp.eq.s32.totalorder %s135, 0
      %s138 = sadd.s32 %s137, 1
      %s139 = scalar_select %p136, %s137, %s138
      %p142 = pneg %p136
      %p143 = scmp.eq.s32.totalorder %s20, 1
      %p144 = por %p142, %p143
      %p145 = scmp.ne.s32.totalorder %s137, %s140
      %p146 = scmp.eq.s32.totalorder %s20, 0
      %p147 = por %p145, %p146
      %p148 = scmp.ne.s32.totalorder %s137, %s140
      %p149 = scmp.eq.s32.totalorder %s25, 1
      %p150 = por %p148, %p149
      %p151 = scmp.ne.s32.totalorder %s140, %s141
      %p152 = scmp.eq.s32.totalorder %s25, 0
      %p153 = por %p151, %p152
      %p154 = scmp.ne.s32.totalorder %s140, %s141
      %p155 = scmp.eq.s32.totalorder %s26, 1
      %p156 = por %p154, %p155
      %p158 = scmp.ne.s32.totalorder %s141, %s157
      %p159 = scmp.eq.s32.totalorder %s26, 0
      %p160 = por %p158, %p159
      %s161 = ssub.s32 %s27, %s46
      %p162 = scmp.eq.s32.totalorder %s161, 0
      %s164 = sadd.s32 %s163, 1
      %s165 = scalar_select %p162, %s163, %s164
      %p168 = pneg %p162
      %p169 = scmp.eq.s32.totalorder %s20, 1
      %p170 = por %p168, %p169
      %p171 = scmp.ne.s32.totalorder %s163, %s166
      %p172 = scmp.eq.s32.totalorder %s20, 0
      %p173 = por %p171, %p172
      %p174 = scmp.ne.s32.totalorder %s163, %s166
      %p175 = scmp.eq.s32.totalorder %s25, 1
      %p176 = por %p174, %p175
      %p177 = scmp.ne.s32.totalorder %s166, %s167
      %p178 = scmp.eq.s32.totalorder %s25, 0
      %p179 = por %p177, %p178
      %p180 = scmp.ne.s32.totalorder %s166, %s167
      %p181 = scmp.eq.s32.totalorder %s26, 1
      %p182 = por %p180, %p181
      %p184 = scmp.ne.s32.totalorder %s167, %s183
      %p185 = scmp.eq.s32.totalorder %s26, 0
      %p186 = por %p184, %p185
      %p187 = scmp.le.s32.totalorder 1, %s20
      %p188 = scmp.lt.s32.totalorder %s20, 3
      %p189 = pnand %p187, %p188
      %p190 = pneg %p189
      // Predicated region
      $region9: #{tpu_custom_call.1} parent=5 // pred_check
        _
      $region10: #{tpu_custom_call.1} parent=5 // pred_check_branch
        %192 = sbr.rel (%p189) target = $region12
      $region11: #{tpu_custom_call.1} parent=5 // pred_region
        %s193 = ssub.s32 %s20, 1
      $region12: #{tpu_custom_call.1} parent=5 // pred_fallthru
        _
      %p194 = scmp.lt.s32.totalorder %s20, 2
      // Predicated region
      $region13: #{tpu_custom_call.1} parent=5 // pred_check
        %p195 = pneg %p194
      $region14: #{tpu_custom_call.1} parent=5 // pred_check_branch
        %197 = sbr.rel (%p195) target = $region16
      $region15: #{tpu_custom_call.1} parent=5 // pred_region
        // Predicated region
        $region17: #{tpu_custom_call.1} parent=15 // pred_check
          %p198 = pneg %p63
        $region18: #{tpu_custom_call.1} parent=15 // pred_check_branch
          %200 = sbr.rel (%p198) target = $region20
        $region19: #{tpu_custom_call.1} parent=15 // pred_region
          %s201 = sadd.s32 %s27, %s28
          %s202 = smul.u32 4, %s201
          %p203 = scmp.lt.s32.totalorder %s202, 7
          %s204 = scalar_select %p203, %s202, 7
          %p205 = scmp.lt.s32.totalorder %s29, 0
          %s206 = scalar_select %p205, %s29, 0
          %s207 = sadd.s32 %s206, %s204
          %s208 = smul.addr %s207, 8
          %s209 = scalar_lea.vmem %s0, %s208
          %s210 = sadd.s32 %s27, %s28
          %s211 = smul.u32 4, %s210
        $region20: #{tpu_custom_call.1} parent=15 // pred_fallthru
          _
        // Predicated region
        $region21: #{tpu_custom_call.1} parent=15 // pred_check
          %p212 = pneg %p93
        $region22: #{tpu_custom_call.1} parent=15 // pred_check_branch
          %214 = sbr.rel (%p212) target = $region24
        $region23: #{tpu_custom_call.1} parent=15 // pred_region
          %s215 = sand.u32 %s83, 1
          %s216 = scalar_lea.sflag [#allocation5], %s215
          %s217 = sand.u32 %s83, 1
          %s218 = smul.addr %s217, 32
          %s219 = scalar_lea.vmem [#allocation4], %s218
          %s220 = sadd.s32 %s27, %s28
          %s221 = smul.u32 4, %s220
          %s223 = ssub.s32 512, 512
          %224 = vsyncadd %s216, %s223
          %s225 = sadd.s32 %s29, %s221
          %s226 = smul.addr %s225, 128
          %s227 = scalar_lea.hbm %s1, %s226
          %s228 = sshll.u32 %s219, 4
          %s229 = int_to_ptr.vmem [resolvable:$true] %s228
          %234 = dma.hbm_to_vmem [thread:$0]  %s227, 512, %s229, %s216, 128, 128, 8
        $region24: #{tpu_custom_call.1} parent=15 // pred_fallthru
          _
        // Predicated region
        $region25: #{tpu_custom_call.1} parent=15 // pred_check
          %p235 = pneg %p121
        $region26: #{tpu_custom_call.1} parent=15 // pred_check_branch
          %237 = sbr.rel (%p235) target = $region28
        $region27: #{tpu_custom_call.1} parent=15 // pred_region
          %s238 = sadd.s32 %s27, %s28
          %s239 = smul.u32 4, %s238
          %p240 = scmp.lt.s32.totalorder %s239, 7
          %s241 = scalar_select %p240, %s239, 7
          %s242 = smul.addr %s241, 8
          %s243 = scalar_lea.vmem %s2, %s242
          %s244 = sadd.s32 %s27, %s28
          %s245 = smul.u32 4, %s244
        $region28: #{tpu_custom_call.1} parent=15 // pred_fallthru
          _
      $region16: #{tpu_custom_call.1} parent=5 // pred_fallthru
        _
      %p246 = scmp.le.s32.totalorder 1, %s20
      %p247 = scmp.lt.s32.totalorder %s20, 3
      %p248 = pnand %p246, %p247
      %p249 = pneg %p248
      // Predicated region
      $region29: #{tpu_custom_call.1} parent=5 // pred_check
        _
      $region30: #{tpu_custom_call.1} parent=5 // pred_check_branch
        %251 = sbr.rel (%p248) target = $region32
      $region31: #{tpu_custom_call.1} parent=5 // pred_region
        %s252 = ssub.s32 %s20, 1
        %s253 = sand.u32 %s86, 1
        %s254 = scalar_lea.sflag [#allocation5], %s253
        %s255 = sand.u32 %s86, 1
        %s256 = smul.addr %s255, 32
        %s257 = scalar_lea.vmem [#allocation4], %s256
        // Predicated region
        $region33: #{tpu_custom_call.1} parent=31 // pred_check
          %p258 = pneg %p99
        $region34: #{tpu_custom_call.1} parent=31 // pred_check_branch
          %260 = sbr.rel (%p258) target = $region36
        $region35: #{tpu_custom_call.1} parent=31 // pred_region
          %261 = dma.done %s254, 512
        $region36: #{tpu_custom_call.1} parent=31 // pred_fallthru
          _
        %s262 = sadd.s32 %s30, %s31
        %s263 = smul.u32 4, %s262
        %p264 = scmp.lt.s32.totalorder %s263, 7
        %s265 = scalar_select %p264, %s263, 7
        %p266 = scmp.lt.s32.totalorder %s32, 0
        %s267 = scalar_select %p266, %s32, 0
        %s268 = sadd.s32 %s267, %s265
        %s269 = smul.addr %s268, 8
        %s270 = scalar_lea.vmem %s0, %s269
        %p271 = pneg %p69
        %p272 = pneg %p66
        %s273 = sand.u32 %s86, 1
        %s274 = scalar_lea.sflag [#allocation5], %s273
        %s275 = sand.u32 %s86, 1
        %s276 = smul.addr %s275, 32
        %s277 = scalar_lea.vmem [#allocation4], %s276
        %p278 = pneg %p99
        %p279 = pneg %p96
        %s280 = sadd.s32 %s30, %s31
        %s281 = smul.u32 4, %s280
        %p282 = scmp.lt.s32.totalorder %s281, 7
        %s283 = scalar_select %p282, %s281, 7
        %s284 = smul.addr %s283, 8
        %s285 = scalar_lea.vmem %s2, %s284
        %p286 = pneg %p127
        %p287 = pneg %p124
        %p288 = pneg %p153
        %p289 = pneg %p150
        %s290 = sand.u32 %s140, 1
        %s291 = scalar_lea.sflag [#allocation6], %s290
        %s292 = sand.u32 %s140, 1
        %s293 = smul.addr %s292, 8
        %s294 = scalar_lea.vmem [#allocation7], %s293
        %p295 = pneg %p179
        %p296 = pneg %p176
        %s297 = sand.u32 %s166, 1
        %s298 = scalar_lea.sflag [#allocation9], %s297
        %s299 = sand.u32 %s166, 1
        %s300 = smul.addr %s299, 8
        %s301 = scalar_lea.vmem [#allocation8], %s300
        %s302 = sadd.s32 %s30, %s31
        %s303 = smul.u32 4, %s302
        %p304 = scmp.lt.s32.totalorder %s303, 7
        %s305 = scalar_select %p304, %s303, 7
        %p306 = scmp.lt.s32.totalorder %s32, 0
        %s307 = scalar_select %p306, %s32, 0
        %s308 = sadd.s32 %s307, %s305
        %s309 = smul.addr %s308, 8
        %s310 = scalar_lea.vmem %s0, %s309
        %s311 = sadd.s32 %s30, %s31
        %s312 = smul.u32 4, %s311
        %s313 = sadd.s32 %s30, %s31
        %s314 = smul.u32 4, %s313
        %s315 = sadd.s32 %s30, %s31
        %s316 = smul.u32 4, %s315
        %p317 = scmp.lt.s32.totalorder %s316, 7
        %s318 = scalar_select %p317, %s316, 7
        %s319 = smul.addr %s318, 8
        %s320 = scalar_lea.vmem %s2, %s319
        %s321 = sadd.s32 %s30, %s31
        %s322 = smul.u32 4, %s321
        %p323 = scmp.eq.s32.totalorder %s31, 0
        %p324 = scmp.eq.s32.totalorder %s32, 0
        %p325 = pnand %p323, %p324
        %p326 = pneg %p325
        // Predicated region
        $region37: #{tpu_custom_call.1} parent=31 // pred_check
          _
        $region38: #{tpu_custom_call.1} parent=31 // pred_check_branch
          %328 = sbr.rel (%p325) target = $region40
        $region39: #{tpu_custom_call.1} parent=31 // pred_region
          %329 = vst [vmem:[#allocation2] sm:$0xff] 0.0
          %330 = vst [vmem:[#allocation2 + $0x8] sm:$0xff] 0.0
          %331 = vst [vmem:[#allocation2 + $0x10] sm:$0xff] 0.0
          %332 = vst [vmem:[#allocation2 + $0x18] sm:$0xff] 0.0
          %s333 = scalar_lea.smem [#allocation3], 0
          %334 = sst [smem:[%s333]] 0.0
        $region40: #{tpu_custom_call.1} parent=31 // pred_fallthru
          _
        %v335 = vld [vmem:[%s310] sm:$0xff]
        %v336 = vld [vmem:[%s310 + $0x8] sm:$0xff]
        %v337 = vld [vmem:[%s310 + $0x10] sm:$0xff]
        %v338 = vld [vmem:[%s310 + $0x18] sm:$0xff]
        %v339 = vld [vmem:[%s257] sm:$0xff]
        %v340 = vld [vmem:[%s257 + $0x8] sm:$0xff]
        %v341 = vld [vmem:[%s257 + $0x10] sm:$0xff]
        %v342 = vld [vmem:[%s257 + $0x18] sm:$0xff]
        %v343 = vsub.f32 %v335, %v339
        %v344 = vsub.f32 %v336, %v340
        %v345 = vsub.f32 %v337, %v341
        %v346 = vsub.f32 %v338, %v342
        %v347 = vand.u32 2147483647, %v343
        %v348 = vand.u32 2147483647, %v344
        %v349 = vand.u32 2147483647, %v345
        %v350 = vand.u32 2147483647, %v346
        %v351 = vld [vmem:[#allocation2] sm:$0xff]
        %v352 = vld [vmem:[#allocation2 + $0x8] sm:$0xff]
        %v353 = vld [vmem:[#allocation2 + $0x10] sm:$0xff]
        %v354 = vld [vmem:[#allocation2 + $0x18] sm:$0xff]
        %vm355 = vcmp.lt.f32.partialorder %v347, 1.0
        %vm356 = vcmp.lt.f32.partialorder %v348, 1.0
        %vm357 = vcmp.lt.f32.partialorder %v349, 1.0
        %vm358 = vcmp.lt.f32.partialorder %v350, 1.0
        %v359 = vmul.f32 %v343, 0.5
        %v360 = vmul.f32 %v344, 0.5
        %v361 = vmul.f32 %v345, 0.5
        %v362 = vmul.f32 %v346, 0.5
        %v363 = vmul.f32 %v359, %v343
        %v364 = vmul.f32 %v360, %v344
        %v365 = vmul.f32 %v361, %v345
        %v366 = vmul.f32 %v362, %v346
        %v367 = vsub.f32 %v347, 0.5
        %v368 = vsub.f32 %v348, 0.5
        %v369 = vsub.f32 %v349, 0.5
        %v370 = vsub.f32 %v350, 0.5
        %v371 = vsel %vm355, %v363, %v367
        %v372 = vsel %vm356, %v364, %v368
        %v373 = vsel %vm357, %v365, %v369
        %v374 = vsel %vm358, %v366, %v370
        %v375 = vadd.f32 %v351, %v371
        %v376 = vadd.f32 %v352, %v372
        %v377 = vadd.f32 %v353, %v373
        %v378 = vadd.f32 %v354, %v374
        %379 = vst [vmem:[#allocation2] sm:$0xff] %v375
        %380 = vst [vmem:[#allocation2 + $0x8] sm:$0xff] %v376
        %381 = vst [vmem:[#allocation2 + $0x10] sm:$0xff] %v377
        %382 = vst [vmem:[#allocation2 + $0x18] sm:$0xff] %v378
        // Predicated region
        $region41: #{tpu_custom_call.1} parent=31 // pred_check
          %p383 = pneg %p324
        $region42: #{tpu_custom_call.1} parent=31 // pred_check_branch
          %385 = sbr.rel (%p383) target = $region44
        $region43: #{tpu_custom_call.1} parent=31 // pred_region
          %v386 = vld [vmem:[%s320] sm:$0xff]
          %v387 = vld [vmem:[%s320 + $0x8] sm:$0xff]
          %v388 = vld [vmem:[%s320 + $0x10] sm:$0xff]
          %v389 = vld [vmem:[%s320 + $0x18] sm:$0xff]
          %vm390 = vcmask 31744
          %v391 = vsel %vm390, %v386, 0.0
          %392 = vadd.xlane.f32.xlu0 %v391
          %v393 = vpop.xlane.xlu0 %392
          %v394 = vsel %vm390, %v387, 0.0
          %395 = vadd.xlane.f32.xlu0 %v394
          %v396 = vpop.xlane.xlu0 %395
          %v397 = vsel %vm390, %v388, 0.0
          %398 = vadd.xlane.f32.xlu0 %v397
          %v399 = vpop.xlane.xlu0 %398
          %v400 = vsel %vm390, %v389, 0.0
          %401 = vadd.xlane.f32.xlu0 %v400
          %v402 = vpop.xlane.xlu0 %401
          %s403 = sld [smem:[#allocation3]]
          %v404 = vsub.f32 %v393, 50.0
          %v405 = vsub.f32 %v396, 50.0
          %v406 = vsub.f32 %v399, 50.0
          %v407 = vsub.f32 %v402, 50.0
          %v408 = vmax.f32 %v404, 0.0
          %v409 = vmax.f32 %v405, 0.0
          %v410 = vmax.f32 %v406, 0.0
          %v411 = vmax.f32 %v407, 0.0
          %vm412 = vcmask 7168
          %v413 = vsel %vm412, %v408, 0.0
          %v414 = vsel %vm412, %v409, 0.0
          %v415 = vadd.f32 %v413, %v414
          %v416 = vsel %vm412, %v410, 0.0
          %v417 = vadd.f32 %v415, %v416
          %v418 = vsel %vm412, %v411, 0.0
          %v419 = vadd.f32 %v417, %v418
          %420 = vadd.xlane.f32.xlu0 %v419
          %v421 = vpop.xlane.xlu0 %420
          %v422 = vrot.slane %v421, 4
          %v423 = vadd.f32 %v421, %v422
          %v424 = vrot.slane %v423, 2
          %v425 = vadd.f32 %v423, %v424
          %v426 = vrot.slane %v425, 1
          %v427 = vadd.f32 %v425, %v426
          %s428 = vtos %v427
          %s429 = sadd.f32 %s403, %s428
          %s430 = scalar_lea.smem [#allocation3], 0
          %431 = sst [smem:[%s430]] %s429
        $region44: #{tpu_custom_call.1} parent=31 // pred_fallthru
          _
        // Predicated region
        $region45: #{tpu_custom_call.1} parent=31 // pred_check
          _
        $region46: #{tpu_custom_call.1} parent=31 // pred_check_branch
          %433 = sbr.rel (%p325) target = $region48
        $region47: #{tpu_custom_call.1} parent=31 // pred_region
          %v434 = vld [vmem:[#allocation2] sm:$0xff]
          %v435 = vld [vmem:[#allocation2 + $0x8] sm:$0xff]
          %v436 = vld [vmem:[#allocation2 + $0x10] sm:$0xff]
          %v437 = vld [vmem:[#allocation2 + $0x18] sm:$0xff]
          %v438 = vadd.f32 %v434, %v435
          %v439 = vadd.f32 %v438, %v436
          %v440 = vadd.f32 %v439, %v437
          %441 = vadd.xlane.f32.xlu0 %v440
          %v442 = vpop.xlane.xlu0 %441
          %v443 = vrot.slane %v442, 4
          %v444 = vadd.f32 %v442, %v443
          %v445 = vrot.slane %v444, 2
          %v446 = vadd.f32 %v444, %v445
          %v447 = vrot.slane %v446, 1
          %v448 = vadd.f32 %v446, %v447
          %s449 = vtos %v448
          %v450 = vstv %s449
          %451 = vst [vmem:[%s294] sm:$0xff] %v450
          %s452 = sld [smem:[#allocation3]]
          %v453 = vstv %s452
          %454 = vst [vmem:[%s301] sm:$0xff] %v453
        $region48: #{tpu_custom_call.1} parent=31 // pred_fallthru
          _
        %s455 = sand.u32 %s140, 1
        %s456 = scalar_lea.sflag [#allocation6], %s455
        %s457 = sand.u32 %s140, 1
        %s458 = smul.addr %s457, 8
        %s459 = scalar_lea.vmem [#allocation7], %s458
        %s460 = sand.u32 %s166, 1
        %s461 = scalar_lea.sflag [#allocation9], %s460
        %s462 = sand.u32 %s166, 1
        %s463 = smul.addr %s462, 8
        %s464 = scalar_lea.vmem [#allocation8], %s463
        // Predicated region
        $region49: #{tpu_custom_call.1} parent=31 // pred_check
          %p465 = pneg %p150
        $region50: #{tpu_custom_call.1} parent=31 // pred_check_branch
          %467 = sbr.rel (%p465) target = $region52
        $region51: #{tpu_custom_call.1} parent=31 // pred_region
          %s469 = ssub.s32 128, 128
          %470 = vsyncadd %s456, %s469
          %s471 = smul.addr %s30, 128
          %s472 = scalar_lea.hbm %s3, %s471
          %s474 = sshll.u32 %s459, 4
          %s475 = int_to_ptr.vmem [resolvable:$true] %s474
          %477 = dma.vmem_to_hbm [thread:$0]  %s475, 128, %s472, %s456
        $region52: #{tpu_custom_call.1} parent=31 // pred_fallthru
          _
        // Predicated region
        $region53: #{tpu_custom_call.1} parent=31 // pred_check
          %p478 = pneg %p176
        $region54: #{tpu_custom_call.1} parent=31 // pred_check_branch
          %480 = sbr.rel (%p478) target = $region56
        $region55: #{tpu_custom_call.1} parent=31 // pred_region
          %s482 = ssub.s32 128, 128
          %483 = vsyncadd %s461, %s482
          %s484 = smul.addr %s30, 128
          %s485 = scalar_lea.hbm %s4, %s484
          %s487 = sshll.u32 %s464, 4
          %s488 = int_to_ptr.vmem [resolvable:$true] %s487
          %490 = dma.vmem_to_hbm [thread:$0]  %s488, 128, %s485, %s461
        $region56: #{tpu_custom_call.1} parent=31 // pred_fallthru
          _
      $region32: #{tpu_custom_call.1} parent=5 // pred_fallthru
        _
      %p491 = scmp.le.s32.totalorder 2, %s20
      // Predicated region
      $region57: #{tpu_custom_call.1} parent=5 // pred_check
        %p492 = pneg %p491
      $region58: #{tpu_custom_call.1} parent=5 // pred_check_branch
        %494 = sbr.rel (%p492) target = $region60
      $region59: #{tpu_custom_call.1} parent=5 // pred_region
        %s495 = ssub.s32 %s20, 2
        // Predicated region
        $region61: #{tpu_custom_call.1} parent=59 // pred_check
          %p496 = pneg %p156
        $region62: #{tpu_custom_call.1} parent=59 // pred_check_branch
          %498 = sbr.rel (%p496) target = $region64
        $region63: #{tpu_custom_call.1} parent=59 // pred_region
          %s499 = sand.u32 %s141, 1
          %s500 = scalar_lea.sflag [#allocation6], %s499
          %s501 = sand.u32 %s141, 1
          %s502 = smul.addr %s501, 8
          %s503 = scalar_lea.vmem [#allocation7], %s502
          %504 = dma.done %s500, 128
        $region64: #{tpu_custom_call.1} parent=59 // pred_fallthru
          _
        // Predicated region
        $region65: #{tpu_custom_call.1} parent=59 // pred_check
          %p505 = pneg %p182
        $region66: #{tpu_custom_call.1} parent=59 // pred_check_branch
          %507 = sbr.rel (%p505) target = $region68
        $region67: #{tpu_custom_call.1} parent=59 // pred_region
          %s508 = sand.u32 %s167, 1
          %s509 = scalar_lea.sflag [#allocation9], %s508
          %s510 = sand.u32 %s167, 1
          %s511 = smul.addr %s510, 8
          %s512 = scalar_lea.vmem [#allocation8], %s511
          %513 = dma.done %s509, 128
        $region68: #{tpu_custom_call.1} parent=59 // pred_fallthru
          _
      $region60: #{tpu_custom_call.1} parent=5 // pred_fallthru
        _
    $region6: #{tpu_custom_call.1} parent=1 // loop_footer
      %s24 = sadd.s32 1, %s20
    $region7: #{tpu_custom_call.1} parent=1 // loop_footer_branch
      %19 = sbr.rel target = $region3
    $region8: #{tpu_custom_call.1} parent=1 // loop_exit
      _
    %514 = vsyncpa [#allocation5], 1
    %s515 = scalar_lea.sflag [#allocation5], 1
    %516 = vsyncpa %s515, 1
    %517 = vsyncpa [#allocation6], 1
    %s518 = scalar_lea.sflag [#allocation6], 1
    %519 = vsyncpa %s518, 1
    %520 = vsyncpa [#allocation9], 1
    %s521 = scalar_lea.sflag [#allocation9], 1
    %522 = vsyncpa %s521, 1

</llo_original>
